<compile_context>
chip_gen: v5e
topology: v5e:2x2
jax: 0.10.0
libtpu: 0.0.40
codegen_flags: <defaults>
</compile_context>

<pallas_src>
import jax
import jax.numpy as jnp
from jax.experimental import pallas as pl
from jax.experimental.pallas import tpu as pltpu


def attn_agg_kernel(x_ref, w_ref, o_ref):
    # x_ref: (TB, N, H) in x.dtype; w_ref: (1, H) in x.dtype; o_ref: (TB, H).
    x = x_ref[...]
    w = w_ref[...]

    # Linear(H -> 1) without the bias (softmax over N is shift-invariant).
    # Multiply in x.dtype (bf16 VALU fast path on v6e/v7x), accumulate the
    # lane (H) reduction in f32.  Result is lane-dense: N sits on lanes.
    scores = jnp.sum((x * w).astype(jnp.float32), axis=-1)        # (TB, N) f32

    # Numerically stable softmax over the n_items axis (lane axis here).
    m = jnp.max(scores, axis=-1, keepdims=True)                   # (TB, 1)
    e = jnp.exp(scores - m)                                       # (TB, N)
    denom = jnp.sum(e, axis=-1, keepdims=True)                    # (TB, 1)
    # EUP approximate reciprocal (free slot) + one Newton step -> ~f32 accuracy.
    r = pl.reciprocal(denom, approx=True)
    r = r * (2.0 - denom * r)

    # Deferred normalization (flash-style): acc[t, h] = sum_n e[t, n] x[t, n, h]
    # and only the final (TB, H) slab gets scaled by 1/denom.
    ew = e.astype(x.dtype)[:, :, None]                            # (TB, N, 1)
    acc = jnp.sum((x * ew).astype(jnp.float32), axis=1)           # (TB, H) f32
    o_ref[...] = (acc * r).astype(o_ref.dtype)


def _round_up(v, m):
    return (v + m - 1) // m * m


def _vmem_capacity_bytes():
    try:
        return int(pltpu.get_tpu_info().vmem_capacity_bytes)
    except Exception:
        return 64 * 1024 * 1024  # conservative (v7x-sized) fallback


def _choose_tiling(batch, n_items, hidden, itemsize):
    """Batch rows per grid step + an explicit scoped-VMEM limit."""
    row_mult = 8 if itemsize >= 4 else 16            # sublane granularity
    # Padded VMEM footprint of one batch row: H rounded to 128 lanes, N to the
    # sublane multiple (the VMEM tile is padded even though HBM traffic isn't).
    padded_row = _round_up(n_items, row_mult) * _round_up(hidden, 128) * itemsize

    cap = _vmem_capacity_bytes()
    # ~6 MiB blocks already sit at ~85%+ of the HBM roofline; keep the whole
    # pipelined footprint (2 input buffers + block-sized f32 temporaries)
    # comfortably inside v7x's 64 MiB as well as v5e/v6e's 128 MiB.
    block_budget = min(6 * 1024 * 1024, max(1024 * 1024, cap // 12))

    tb = max(row_mult, (block_budget // padded_row) // row_mult * row_mult)
    if batch > row_mult:
        # Guarantee >= 2 grid steps: overlaps DMA with compute and lets the
        # "parallel" batch axis shard across both v7x TensorCores.
        tb = min(tb, _round_up((batch + 1) // 2, row_mult))
    tb = min(tb, _round_up(batch, row_mult))

    # Explicit scoped-VMEM limit: double-buffered input block plus a few
    # block-sized temporaries, capped below physical capacity.
    vmem_limit = int(min(0.8 * cap, max(32 * 1024 * 1024, 8 * tb * padded_row)))
    return tb, vmem_limit


def simple_attention_aggregator(x, weight, bias=None):
    """x: [B, N, H]; weight: [1, H]; bias: [1]/[1,1]/None  ->  [B, H].

    `bias` is accepted for API parity with nn.Linear(hidden_units, 1) but is
    mathematically irrelevant here: softmax over the n_items axis is invariant
    to a per-row constant shift, so it is dropped from the kernel.
    """
    del bias
    B, N, H = x.shape
    TB, vmem_limit = _choose_tiling(B, N, H, x.dtype.itemsize)
    Bp = _round_up(B, TB)
    if Bp != B:
        # Padded rows are all zeros: scores are constant, the softmax is
        # uniform and the weighted sum is 0 -> no NaNs; sliced off below.
        x = jnp.pad(x, ((0, Bp - B), (0, 0), (0, 0)))

    w = jnp.reshape(weight, (1, H)).astype(x.dtype)

    # TODO(synk): tile N (flash-style online softmax) if n_items*hidden ever
    # exceeds the per-block VMEM budget; realistic SASRec shapes fit whole.
    out = pl.pallas_call(
        attn_agg_kernel,
        out_shape=jax.ShapeDtypeStruct((Bp, H), x.dtype),
        grid=(Bp // TB,),
        in_specs=[
            pl.BlockSpec((TB, N, H), lambda i: (i, 0, 0)),
            pl.BlockSpec((1, H), lambda i: (0, 0)),
        ],
        out_specs=pl.BlockSpec((TB, H), lambda i: (i, 0)),
        compiler_params=pltpu.CompilerParams(
            dimension_semantics=("parallel",),
            vmem_limit_bytes=vmem_limit,
        ),
    )(x, w)
    return out[:B]


def _reference(x, weight, bias):
    # Plain-JAX reference mirroring the PyTorch forward (bias included).
    scores = jnp.einsum("bnh,h->bn", x.astype(jnp.float32),
                        jnp.reshape(weight, (-1,)).astype(jnp.float32))
    scores = scores + jnp.reshape(bias, ()).astype(jnp.float32)
    w = jax.nn.softmax(scores, axis=1)[..., None]                  # [B, N, 1]
    return jnp.sum(x.astype(jnp.float32) * w, axis=1).astype(x.dtype)


if __name__ == "__main__":
    # Case 1: small, aligned-ish shapes.
    B, N, H = 2, 8, 32  # batch, n_items (seq), hidden_units
    kx, kw, kb = jax.random.split(jax.random.PRNGKey(0), 3)
    x = jax.random.normal(kx, (B, N, H), dtype=jnp.float32)
    bound = 1.0 / (H ** 0.5)
    attn_weight = jax.random.uniform(kw, (1, H), jnp.float32, -bound, bound)
    attn_bias = jax.random.uniform(kb, (1,), jnp.float32, -bound, bound)

    out = jax.block_until_ready(
        simple_attention_aggregator(x, attn_weight, attn_bias))
    ref = _reference(x, attn_weight, attn_bias)
    assert out.shape == (B, H)
    assert jnp.allclose(out, ref, atol=1e-5, rtol=1e-5)

    # Case 2: un-aligned shapes (exercises batch padding + lane/sublane padding).
    B2, N2, H2 = 5, 7, 48
    kx2, kw2, kb2 = jax.random.split(jax.random.PRNGKey(1), 3)
    x2 = jax.random.normal(kx2, (B2, N2, H2), dtype=jnp.float32)
    bound2 = 1.0 / (H2 ** 0.5)
    w2 = jax.random.uniform(kw2, (1, H2), jnp.float32, -bound2, bound2)
    b2 = jax.random.uniform(kb2, (1,), jnp.float32, -bound2, bound2)
    out2 = jax.block_until_ready(simple_attention_aggregator(x2, w2, b2))
    ref2 = _reference(x2, w2, b2)
    assert out2.shape == (B2, H2)
    assert jnp.allclose(out2, ref2, atol=1e-5, rtol=1e-5)

    print("KERNEL_OK")
</pallas_src>

<mosaic_0001>
module attributes {stable_mosaic.version = 11 : i64} {
  func.func @attn_agg_kernel(%arg0: i32, %arg1: memref<8x8x32xf32, #tpu.memory_space<vmem>>, %arg2: memref<1x32xf32, #tpu.memory_space<vmem>>, %arg3: memref<8x32xf32, #tpu.memory_space<vmem>>) attributes {dimension_semantics = [#tpu.dimension_semantics<parallel>], iteration_bounds = array<i64: 1>, scalar_prefetch = 0 : i64, scratch_operands = 0 : i64, tpu.core_type = #tpu.core_type<tc>, window_params = [{transform_indices = @transform_0, window_bounds = array<i64: 8, 8, 32>}, {pipeline_mode = #tpu.pipeline_mode<synchronous>, transform_indices = @transform_1, window_bounds = array<i64: 1, 32>}, {transform_indices = @transform_2, window_bounds = array<i64: 8, 32>}]} {
    %c0 = arith.constant 0 : index
    %c0_0 = arith.constant 0 : index
    %c0_1 = arith.constant 0 : index
    %0 = vector.load %arg1[%c0, %c0_0, %c0_1] : memref<8x8x32xf32, #tpu.memory_space<vmem>>, vector<8x8x32xf32>
    %c0_2 = arith.constant 0 : index
    %c0_3 = arith.constant 0 : index
    %1 = vector.load %arg2[%c0_2, %c0_3] : memref<1x32xf32, #tpu.memory_space<vmem>>, vector<1x32xf32>
    %2 = vector.shape_cast %1 : vector<1x32xf32> to vector<1x1x32xf32>
    %3 = vector.broadcast %2 : vector<1x1x32xf32> to vector<8x8x32xf32>
    %4 = arith.mulf %0, %3 : vector<8x8x32xf32>
    %cst = arith.constant dense<0.000000e+00> : vector<8x8xf32>
    %5 = vector.multi_reduction <add>, %4, %cst [2] : vector<8x8x32xf32> to vector<8x8xf32>
    %cst_4 = arith.constant dense<0xFF800000> : vector<8xf32>
    %6 = vector.multi_reduction <maximumf>, %5, %cst_4 [1] : vector<8x8xf32> to vector<8xf32>
    %7 = vector.shape_cast %6 : vector<8xf32> to vector<8x1xf32>
    %8 = vector.broadcast %7 : vector<8x1xf32> to vector<8x8xf32>
    %9 = arith.subf %5, %8 : vector<8x8xf32>
    %10 = math.exp %9 : vector<8x8xf32>
    %cst_5 = arith.constant dense<0.000000e+00> : vector<8xf32>
    %11 = vector.multi_reduction <add>, %10, %cst_5 [1] : vector<8x8xf32> to vector<8xf32>
    %12 = vector.shape_cast %11 : vector<8xf32> to vector<8x1xf32>
    %13 = tpu.reciprocal %12 {approx = true} : vector<8x1xf32> -> vector<8x1xf32>
    %14 = arith.mulf %12, %13 : vector<8x1xf32>
    %cst_6 = arith.constant 2.000000e+00 : f32
    %15 = vector.broadcast %cst_6 : f32 to vector<8x1xf32>
    %16 = arith.subf %15, %14 : vector<8x1xf32>
    %17 = arith.mulf %13, %16 : vector<8x1xf32>
    %18 = vector.shape_cast %10 : vector<8x8xf32> to vector<8x8x1xf32>
    %19 = vector.broadcast %18 : vector<8x8x1xf32> to vector<8x8x32xf32>
    %20 = arith.mulf %0, %19 : vector<8x8x32xf32>
    %cst_7 = arith.constant dense<0.000000e+00> : vector<8x32xf32>
    %21 = vector.multi_reduction <add>, %20, %cst_7 [1] : vector<8x8x32xf32> to vector<8x32xf32>
    %22 = vector.broadcast %17 : vector<8x1xf32> to vector<8x32xf32>
    %23 = arith.mulf %21, %22 : vector<8x32xf32>
    %c0_8 = arith.constant 0 : index
    %c0_9 = arith.constant 0 : index
    %24 = vector.load %arg3[%c0_8, %c0_9] : memref<8x32xf32, #tpu.memory_space<vmem>>, vector<8x32xf32>
    tpu.vector_store %arg3[%c0_8, %c0_9], %23 {strides = array<i32>} : memref<8x32xf32, #tpu.memory_space<vmem>>, vector<8x32xf32>,
    return
  }
  func.func @transform_0(%arg0: i32) -> (i32, i32, i32) {
    %c0_i32 = arith.constant 0 : i32
    %c0_i32_0 = arith.constant 0 : i32
    %c0_i32_1 = arith.constant 0 : i32
    return %arg0, %c0_i32, %c0_i32_0 : i32, i32, i32
  }
  func.func @transform_1(%arg0: i32) -> (i32, i32) {
    %c0_i32 = arith.constant 0 : i32
    %c0_i32_0 = arith.constant 0 : i32
    %c0_i32_1 = arith.constant 0 : i32
    return %c0_i32, %c0_i32_0 : i32, i32
  }
  func.func @transform_2(%arg0: i32) -> (i32, i32) {
    %c0_i32 = arith.constant 0 : i32
    %c0_i32_0 = arith.constant 0 : i32
    return %arg0, %c0_i32 : i32, i32
  }
}

</mosaic_0001>

<llo_original>
// kernel: tpu_custom_call.1
$region0: #{tpu_custom_call.1}
  #allocation0 [shape = 'u32[]', space=smem, size = 0x4, offset = 0x4, fixed_abs, tag = 'smem constant byte address 0x4 - core index']
  #allocation1 [shape = 'u32[72,128]{1,0:T(1,128)}', space=vmem, size = 0x9000, scoped, tag = 'internal scratch']
  %s0 = inlined_call_operand.hbm [shape: f32[8,8,32], index: 0, kind: input, shape index: {}]
  %s1 = inlined_call_operand.hbm [shape: f32[1,32], index: 1, kind: input, shape index: {}]
  %s2 = inlined_call_operand.hbm [shape: f32[8,32], index: 2, kind: output, shape index: {}]
  %s3 = sld [smem:[#allocation0]]
  $region26: #{tpu_custom_call.1} parent=0
    _
  %s5 = ssub.s32 1, %s3
  %s6 = scalar_select 0, %s5, %s3
  $region1: #{tpu_custom_call.1} parent=0
    #allocation2 [shape = 'u8[32768]{0}', space=vmem, size = 0x8000, scoped, tag = 'input window, operand 0, single buffered']
    #allocation3 [shape = 's32[1]{0}', space=sflag, size = 0x4, scoped, tag = 'scoped memory for tpu_custom_call.1']
    #allocation4 [shape = 's32[1]{0}', space=sflag, size = 0x4, scoped, tag = 'scoped memory for tpu_custom_call.1']
    #allocation5 [shape = 'u8[512]{0}', space=vmem, size = 0x400, scoped, tag = 'input window, operand 1, single buffered']
    #allocation6 [shape = 's32[1]{0}', space=sflag, size = 0x4, scoped, tag = 'scoped memory for tpu_custom_call.1']
    #allocation7 [shape = 'u8[4096]{0}', space=vmem, size = 0x1000, scoped, tag = 'output window, operand 0, single buffered']
    %7 = vsyncpa [#allocation3], 0
    %8 = vsyncpa [#allocation6], 0
    %9 = vsyncpa [#allocation4], 0
    // Predicated region
    $region2: #{tpu_custom_call.1} parent=1 // pred_check
      _
    $region3: #{tpu_custom_call.1} parent=1 // pred_check_branch
      %11 = sbr.rel (0) target = $region5
    $region4: #{tpu_custom_call.1} parent=1 // pred_region
      %13 = vsyncadd [#allocation3], 0
      %s14 = sshll.u32 %s0, 4
      %s15 = int_to_ptr.hbm [resolvable:$true] %s14
      %s16 = sshll.u32 [#allocation2], 4
      %s17 = int_to_ptr.vmem [resolvable:$true] %s16
      %22 = dma.hbm_to_vmem [thread:$0]  %s15, 1024, %s17, [#allocation3], 128, 128, 8
    $region5: #{tpu_custom_call.1} parent=1 // pred_fallthru
      _
    // Predicated region
    $region6: #{tpu_custom_call.1} parent=1 // pred_check
      _
    $region7: #{tpu_custom_call.1} parent=1 // pred_check_branch
      %24 = sbr.rel (0) target = $region9
    $region8: #{tpu_custom_call.1} parent=1 // pred_region
      %26 = vsyncadd [#allocation6], 0
      %s28 = sshll.u32 %s1, 4
      %s29 = int_to_ptr.hbm [resolvable:$true] %s28
      %s30 = sshll.u32 [#allocation5], 4
      %s31 = int_to_ptr.vmem [resolvable:$true] %s30
      %33 = dma.hbm_to_vmem [thread:$0]  %s29, 16, %s31, [#allocation6]
    $region9: #{tpu_custom_call.1} parent=1 // pred_fallthru
      _
    // Predicated region
    $region10: #{tpu_custom_call.1} parent=1 // pred_check
      _
    $region11: #{tpu_custom_call.1} parent=1 // pred_check_branch
      %35 = sbr.rel (0) target = $region13
    $region12: #{tpu_custom_call.1} parent=1 // pred_region
      %37 = dma.done [#allocation3], 1024
    $region13: #{tpu_custom_call.1} parent=1 // pred_fallthru
      _
    // Predicated region
    $region14: #{tpu_custom_call.1} parent=1 // pred_check
      _
    $region15: #{tpu_custom_call.1} parent=1 // pred_check_branch
      %39 = sbr.rel (0) target = $region17
    $region16: #{tpu_custom_call.1} parent=1 // pred_region
      %41 = dma.done [#allocation6], 16
    $region17: #{tpu_custom_call.1} parent=1 // pred_fallthru
      _
    %v42 = vld [vmem:[#allocation2] sm:$0xff]
    %v43 = vld [vmem:[#allocation2 + $0x8] sm:$0xff]
    %v44 = vld [vmem:[#allocation2 + $0x10] sm:$0xff]
    %v45 = vld [vmem:[#allocation2 + $0x18] sm:$0xff]
    %v46 = vld [vmem:[#allocation2 + $0x20] sm:$0xff]
    %v47 = vld [vmem:[#allocation2 + $0x28] sm:$0xff]
    %v48 = vld [vmem:[#allocation2 + $0x30] sm:$0xff]
    %v49 = vld [vmem:[#allocation2 + $0x38] sm:$0xff]
    %v50 = vld [vmem:[#allocation5] sm:$0x1]
    %v52 = vperm.slane %v50, 0
    %v54 = vmul.f32 %v42, %v52
    %v55 = vmul.f32 %v43, %v52
    %v56 = vmul.f32 %v44, %v52
    %v57 = vmul.f32 %v45, %v52
    %v58 = vmul.f32 %v46, %v52
    %v59 = vmul.f32 %v47, %v52
    %v60 = vmul.f32 %v48, %v52
    %v61 = vmul.f32 %v49, %v52
    %vm62 = vcmask 261120
    %v63 = vsel %vm62, %v54, 0.0
    %64 = vadd.xlane.f32.xlu0 %v63
    %v65 = vpop.xlane.xlu0 %64
    %v66 = vsel %vm62, %v55, 0.0
    %67 = vadd.xlane.f32.xlu0 %v66
    %v68 = vpop.xlane.xlu0 %67
    %v69 = vsel %vm62, %v56, 0.0
    %70 = vadd.xlane.f32.xlu0 %v69
    %v71 = vpop.xlane.xlu0 %70
    %v72 = vsel %vm62, %v57, 0.0
    %73 = vadd.xlane.f32.xlu0 %v72
    %v74 = vpop.xlane.xlu0 %73
    %v75 = vsel %vm62, %v58, 0.0
    %76 = vadd.xlane.f32.xlu0 %v75
    %v77 = vpop.xlane.xlu0 %76
    %v78 = vsel %vm62, %v59, 0.0
    %79 = vadd.xlane.f32.xlu0 %v78
    %v80 = vpop.xlane.xlu0 %79
    %v81 = vsel %vm62, %v60, 0.0
    %82 = vadd.xlane.f32.xlu0 %v81
    %v83 = vpop.xlane.xlu0 %82
    %v84 = vsel %vm62, %v61, 0.0
    %85 = vadd.xlane.f32.xlu0 %v84
    %v86 = vpop.xlane.xlu0 %85
    %v95 = vlaneseq
    %v96 = vand.u32 %v95, 127
    %v97 = vperm.slane %v65, %v96
    %v98 = vperm.slane %v68, %v96
    %v99 = vperm.slane %v71, %v96
    %v100 = vperm.slane %v74, %v96
    %v101 = vperm.slane %v77, %v96
    %v102 = vperm.slane %v80, %v96
    %v103 = vperm.slane %v83, %v96
    %v104 = vperm.slane %v86, %v96
    %vm105 = vcmask 1041409
    %v106 = vsel %vm105, %v98, %v97
    %vm107 = vcmask 1042434
    %v108 = vsel %vm107, %v99, %v106
    %vm109 = vcmask 1043459
    %v110 = vsel %vm109, %v100, %v108
    %vm111 = vcmask 1044484
    %v112 = vsel %vm111, %v101, %v110
    %vm113 = vcmask 1045509
    %v114 = vsel %vm113, %v102, %v112
    %vm115 = vcmask 1046534
    %v116 = vsel %vm115, %v103, %v114
    %vm117 = vcmask 1047559
    %v118 = vsel %vm117, %v104, %v116
    %vm120 = vcmask 64512
    %v121 = vsel %vm120, %v118, -inf
    %122 = vmax.xlane.f32.xlu0 %v121
    %v123 = vpop.xlane.xlu0 %122
    %v125 = vperm.slane %v123, 0
    %v126 = vperm.slane %v123, 1
    %v127 = vperm.slane %v123, 2
    %v128 = vperm.slane %v123, 3
    %v129 = vperm.slane %v123, 4
    %v130 = vperm.slane %v123, 5
    %v131 = vperm.slane %v123, 6
    %v132 = vperm.slane %v123, 7
    %v141 = vsub.f32 %v65, %v125
    %v142 = vsub.f32 %v68, %v126
    %v143 = vsub.f32 %v71, %v127
    %v144 = vsub.f32 %v74, %v128
    %v145 = vsub.f32 %v77, %v129
    %v146 = vsub.f32 %v80, %v130
    %v147 = vsub.f32 %v83, %v131
    %v148 = vsub.f32 %v86, %v132
    %v149 = vmul.f32 %v141, 1.442695
    %v150 = vpow.pop %v149
    %v151 = vmul.f32 %v142, 1.442695
    %v152 = vpow.pop %v151
    %v153 = vmul.f32 %v143, 1.442695
    %v154 = vpow.pop %v153
    %v155 = vmul.f32 %v144, 1.442695
    %v156 = vpow.pop %v155
    %v157 = vmul.f32 %v145, 1.442695
    %v158 = vpow.pop %v157
    %v159 = vmul.f32 %v146, 1.442695
    %v160 = vpow.pop %v159
    %v161 = vmul.f32 %v147, 1.442695
    %v162 = vpow.pop %v161
    %v163 = vmul.f32 %v148, 1.442695
    %v164 = vpow.pop %v163
    %173 = vset.pattern.permute.xlu0 0
    %174 = vperm.xlu0 %173, %v150
    %v175 = vpop.permute.xlu0 %174
    %176 = vset.pattern.permute.xlu0 0
    %177 = vperm.xlu0 %176, %v152
    %v178 = vpop.permute.xlu0 %177
    %179 = vset.pattern.permute.xlu0 0
    %180 = vperm.xlu0 %179, %v154
    %v181 = vpop.permute.xlu0 %180
    %182 = vset.pattern.permute.xlu0 0
    %183 = vperm.xlu0 %182, %v156
    %v184 = vpop.permute.xlu0 %183
    %185 = vset.pattern.permute.xlu0 0
    %186 = vperm.xlu0 %185, %v158
    %v187 = vpop.permute.xlu0 %186
    %188 = vset.pattern.permute.xlu0 0
    %189 = vperm.xlu0 %188, %v160
    %v190 = vpop.permute.xlu0 %189
    %191 = vset.pattern.permute.xlu0 0
    %192 = vperm.xlu0 %191, %v162
    %v193 = vpop.permute.xlu0 %192
    %194 = vset.pattern.permute.xlu0 0
    %195 = vperm.xlu0 %194, %v164
    %v196 = vpop.permute.xlu0 %195
    %v197 = vperm.slane %v175, %v96
    %v198 = vperm.slane %v178, %v96
    %v199 = vperm.slane %v181, %v96
    %v200 = vperm.slane %v184, %v96
    %v201 = vperm.slane %v187, %v96
    %v202 = vperm.slane %v190, %v96
    %v203 = vperm.slane %v193, %v96
    %v204 = vperm.slane %v196, %v96
    %v205 = vsel %vm105, %v198, %v197
    %v206 = vsel %vm107, %v199, %v205
    %v207 = vsel %vm109, %v200, %v206
    %v208 = vsel %vm111, %v201, %v207
    %v209 = vsel %vm113, %v202, %v208
    %v210 = vsel %vm115, %v203, %v209
    %v211 = vsel %vm117, %v204, %v210
    %v213 = vsel %vm120, %v211, 0.0
    %214 = vadd.xlane.f32.xlu0 %v213
    %v215 = vpop.xlane.xlu0 %214
    %v216 = vrcp.pop %v215
    %v217 = vmul.f32 %v215, %v216
    %v218 = vsub.f32 2.0, %v217
    %v219 = vmul.f32 %v216, %v218
    %v228 = vmul.f32 %v42, %v175
    %v229 = vmul.f32 %v43, %v178
    %v230 = vmul.f32 %v44, %v181
    %v231 = vmul.f32 %v45, %v184
    %v232 = vmul.f32 %v46, %v187
    %v233 = vmul.f32 %v47, %v190
    %v234 = vmul.f32 %v48, %v193
    %v235 = vmul.f32 %v49, %v196
    %v236 = vsel %vm62, %v228, 0.0
    %v237 = vrot.slane %v236, 4
    %v238 = vadd.f32 %v236, %v237
    %v239 = vrot.slane %v238, 2
    %v240 = vadd.f32 %v238, %v239
    %v241 = vrot.slane %v240, 1
    %v242 = vadd.f32 %v240, %v241
    %v243 = vsel %vm62, %v229, 0.0
    %v244 = vrot.slane %v243, 4
    %v245 = vadd.f32 %v243, %v244
    %v246 = vrot.slane %v245, 2
    %v247 = vadd.f32 %v245, %v246
    %v248 = vrot.slane %v247, 1
    %v249 = vadd.f32 %v247, %v248
    %v250 = vsel %vm62, %v230, 0.0
    %v251 = vrot.slane %v250, 4
    %v252 = vadd.f32 %v250, %v251
    %v253 = vrot.slane %v252, 2
    %v254 = vadd.f32 %v252, %v253
    %v255 = vrot.slane %v254, 1
    %v256 = vadd.f32 %v254, %v255
    %v257 = vsel %vm62, %v231, 0.0
    %v258 = vrot.slane %v257, 4
    %v259 = vadd.f32 %v257, %v258
    %v260 = vrot.slane %v259, 2
    %v261 = vadd.f32 %v259, %v260
    %v262 = vrot.slane %v261, 1
    %v263 = vadd.f32 %v261, %v262
    %v264 = vsel %vm62, %v232, 0.0
    %v265 = vrot.slane %v264, 4
    %v266 = vadd.f32 %v264, %v265
    %v267 = vrot.slane %v266, 2
    %v268 = vadd.f32 %v266, %v267
    %v269 = vrot.slane %v268, 1
    %v270 = vadd.f32 %v268, %v269
    %v271 = vsel %vm62, %v233, 0.0
    %v272 = vrot.slane %v271, 4
    %v273 = vadd.f32 %v271, %v272
    %v274 = vrot.slane %v273, 2
    %v275 = vadd.f32 %v273, %v274
    %v276 = vrot.slane %v275, 1
    %v277 = vadd.f32 %v275, %v276
    %v278 = vsel %vm62, %v234, 0.0
    %v279 = vrot.slane %v278, 4
    %v280 = vadd.f32 %v278, %v279
    %v281 = vrot.slane %v280, 2
    %v282 = vadd.f32 %v280, %v281
    %v283 = vrot.slane %v282, 1
    %v284 = vadd.f32 %v282, %v283
    %v285 = vsel %vm62, %v235, 0.0
    %v286 = vrot.slane %v285, 4
    %v287 = vadd.f32 %v285, %v286
    %v288 = vrot.slane %v287, 2
    %v289 = vadd.f32 %v287, %v288
    %v290 = vrot.slane %v289, 1
    %v291 = vadd.f32 %v289, %v290
    %v293 = vrot.slane %v219, 1
    %v294 = vrot.slane %v219, 2
    %v295 = vrot.slane %v219, 3
    %v296 = vrot.slane %v219, 4
    %v297 = vrot.slane %v219, 5
    %v298 = vrot.slane %v219, 6
    %v299 = vrot.slane %v219, 7
    %v308 = vmul.f32 %v242, %v219
    %v309 = vmul.f32 %v249, %v293
    %v310 = vmul.f32 %v256, %v294
    %v311 = vmul.f32 %v263, %v295
    %v312 = vmul.f32 %v270, %v296
    %v313 = vmul.f32 %v277, %v297
    %v314 = vmul.f32 %v284, %v298
    %v315 = vmul.f32 %v291, %v299
    %v324 = vrot.slane %v309, 7
    %v325 = vsel %vm105, %v324, %v308
    %v326 = vrot.slane %v310, 6
    %v327 = vsel %vm107, %v326, %v325
    %v328 = vrot.slane %v311, 5
    %v329 = vsel %vm109, %v328, %v327
    %v330 = vrot.slane %v312, 4
    %v331 = vsel %vm111, %v330, %v329
    %v332 = vrot.slane %v313, 3
    %v333 = vsel %vm113, %v332, %v331
    %v334 = vrot.slane %v314, 2
    %v335 = vsel %vm115, %v334, %v333
    %v336 = vrot.slane %v315, 1
    %v337 = vsel %vm117, %v336, %v335
    %339 = vst.msk [vmem:[#allocation7] sm:$0xff] %vm62, %v337
    // Predicated region
    $region18: #{tpu_custom_call.1} parent=1 // pred_check
      _
    $region19: #{tpu_custom_call.1} parent=1 // pred_check_branch
      %341 = sbr.rel (0) target = $region21
    $region20: #{tpu_custom_call.1} parent=1 // pred_region
      %343 = vsyncadd [#allocation4], 0
      %s345 = sshll.u32 [#allocation7], 4
      %s346 = int_to_ptr.vmem [resolvable:$true] %s345
      %s347 = sshll.u32 %s2, 4
      %s348 = int_to_ptr.hbm [resolvable:$true] %s347
      %350 = dma.vmem_to_hbm [thread:$0]  %s346, 128, %s348, [#allocation4]
    $region21: #{tpu_custom_call.1} parent=1 // pred_fallthru
      _
    // Predicated region
    $region22: #{tpu_custom_call.1} parent=1 // pred_check
      _
    $region23: #{tpu_custom_call.1} parent=1 // pred_check_branch
      %352 = sbr.rel (0) target = $region25
    $region24: #{tpu_custom_call.1} parent=1 // pred_region
      %354 = dma.done [#allocation4], 128
    $region25: #{tpu_custom_call.1} parent=1 // pred_fallthru
      _
    %355 = vsyncpa [#allocation3], 1
    %356 = vsyncpa [#allocation6], 1
    %357 = vsyncpa [#allocation4], 1

</llo_original>
